<compile_context>
chip_gen: v5e
topology: v5e:2x2
jax: 0.10.0
libtpu: 0.0.40
codegen_flags: <defaults>
</compile_context>

<pallas_src>
import math
import functools

import jax
import jax.numpy as jnp
from jax.experimental import pallas as pl
from jax.experimental.pallas import tpu as pltpu

STUDENT_DIM = 16      # normally discovered from a dummy student(..., return_features=True)
TEACHER_DIM = 16      # feature_dim passed to CrossArchitectureKD
GL_GROUPS = 8
DISC_HIDDEN = 256
NUM_CLASSES = 10
NUM_VIEWS = 2
LAMBDA_ROBUST = 1.0


# ----------------------------- Pallas kernels -------------------------------

def conv_kernel(cols_ref, w_ref, b_ref, o_ref):
    # cols_ref: (1, HW, 9*Cin) im2col tile   w_ref: (9*Cin, Cout)   b_ref: (1, Cout)
    # single K=9*Cin MXU matmul (taps folded into the contraction dimension)
    o_ref[0] = jnp.dot(cols_ref[0], w_ref[...],
                       preferred_element_type=jnp.float32) + b_ref[...]


def forward_kernel(cols_ref, wc_ref, bc_ref, wh_ref, bh_ref, o_ref):
    # fused student backbone (3x3 conv) + global average pool + linear classifier head
    feat = jnp.dot(cols_ref[0], wc_ref[...],
                   preferred_element_type=jnp.float32) + bc_ref[...]        # (HW, Sd)
    pooled = jnp.mean(feat, axis=0, keepdims=True)                          # (1, Sd)
    o_ref[0] = jnp.dot(pooled, wh_ref[...],
                       preferred_element_type=jnp.float32) + bh_ref[...]    # (1, n_cls)


def pca_kl_kernel(s_cols_ref, wq_ref, bq_ref, wk_ref, bk_ref, t_ref, o_ref,
                  *, s_scale, t_scale):
    # Fused PCAProjector q/k convs + student attention softmax + teacher attention softmax
    # + F.kl_div(log_softmax(s_att), t_att) accumulation.  The (HW, HW) attention matrices
    # stay in VMEM.  Output: running sum over the batch of per-sample KL sums.
    @pl.when(pl.program_id(0) == 0)
    def _init():
        o_ref[...] = jnp.zeros_like(o_ref)

    cols = s_cols_ref[0]                                                    # (HW, 9*Sd)
    q = jnp.dot(cols, wq_ref[...], preferred_element_type=jnp.float32) + bq_ref[...]
    k = jnp.dot(cols, wk_ref[...], preferred_element_type=jnp.float32) + bk_ref[...]

    s = jax.lax.dot_general(q, k, (((1,), (1,)), ((), ())),
                            preferred_element_type=jnp.float32) * s_scale   # (HW, HW)
    s = s - jnp.max(s, axis=-1, keepdims=True)
    e = jnp.exp(s)
    s_att = e / jnp.sum(e, axis=-1, keepdims=True)          # PCAProjector output (softmax)
    # the reference applies log_softmax ON TOP of the already-softmaxed attention
    z = s_att - jnp.max(s_att, axis=-1, keepdims=True)
    s_ls = z - jnp.log(jnp.sum(jnp.exp(z), axis=-1, keepdims=True))

    t = t_ref[0]                                                            # (HW, Td)
    ts = jax.lax.dot_general(t, t, (((1,), (1,)), ((), ())),
                             preferred_element_type=jnp.float32) * t_scale  # (HW, HW)
    ts = ts - jnp.max(ts, axis=-1, keepdims=True)
    te = jnp.exp(ts)
    tz = jnp.sum(te, axis=-1, keepdims=True)
    t_att = te / tz
    t_log = ts - jnp.log(tz)                                                # log_softmax (exact)

    o_ref[...] += jnp.reshape(jnp.sum(t_att * (t_log - s_ls)), (1, 1))


def gl_mse_disc_kernel(s_ref, t_ref, wg_ref, bg_ref,
                       w1_ref, b1_ref, w2_ref, b2_ref, w3_ref, b3_ref,
                       sse_ref, bce_ref):
    # Fused GLProjector (block-diagonal 1x1 conv) + MSE vs teacher + Discriminator MLP + BCE.
    # s_gl never leaves VMEM.  Outputs: running SSE sum and running BCE sum over the batch.
    @pl.when(pl.program_id(0) == 0)
    def _init():
        sse_ref[...] = jnp.zeros_like(sse_ref)
        bce_ref[...] = jnp.zeros_like(bce_ref)

    s_gl = jnp.dot(s_ref[0], wg_ref[...],
                   preferred_element_type=jnp.float32) + bg_ref[...]        # (HW, Td)
    d = s_gl - t_ref[0]
    sse_ref[...] += jnp.reshape(jnp.sum(d * d), (1, 1))

    # Discriminator: spatial mean + 3-layer MLP (LeakyReLU 0.2), fused with BCE-with-logits
    # against an all-ones target.
    # TODO(synk): nn.Dropout(0.3) is treated as eval-mode identity (stochastic dropout omitted).
    pooled = jnp.mean(s_gl, axis=0, keepdims=True)                          # (1, Td)
    h = jnp.dot(pooled, w1_ref[...], preferred_element_type=jnp.float32) + b1_ref[...]
    h = jnp.where(h > 0, h, 0.2 * h)
    h = jnp.dot(h, w2_ref[...], preferred_element_type=jnp.float32) + b2_ref[...]
    h = jnp.where(h > 0, h, 0.2 * h)
    logit = jnp.dot(h, w3_ref[...], preferred_element_type=jnp.float32) + b3_ref[...]   # (1, 1)
    # BCE-with-logits, target=1  ->  softplus(-logit), stable form
    bce_ref[...] += jnp.maximum(-logit, 0.0) + jnp.log1p(jnp.exp(-jnp.abs(logit)))


# ----------------------------- host-side glue --------------------------------

def im2col3x3(x_nhwc):
    """Same-padding 3x3 im2col: (B, H, W, C) -> (B, H*W, 9*C) in (dy, dx, c) order."""
    B, H, W, C = x_nhwc.shape
    xp = jnp.pad(x_nhwc, ((0, 0), (1, 1), (1, 1), (0, 0)))
    cols = jnp.concatenate(
        [xp[:, dy:dy + H, dx:dx + W, :] for dy in range(3) for dx in range(3)], axis=-1)
    return cols.reshape(B, H * W, 9 * C)


def gl_block_diag(w, b):
    """Per-group (cg_in, cg_out) weights -> block-diagonal (G*cg_in, G*cg_out) matrix."""
    G, ci, co = w.shape
    eye = jnp.eye(G, dtype=w.dtype)
    wbd = (w[:, :, None, :] * eye[:, None, :, None]).reshape(G * ci, G * co)
    return wbd, b.reshape(1, G * co)


# ----------------------------- Pallas wrappers -------------------------------

def conv3x3(x_nhwc, w, b):
    """3x3 same-padding conv.  x_nhwc: (B,H,W,Cin) -> (B, H*W, Cout)."""
    B, H, W, Cin = x_nhwc.shape
    Cout = w.shape[-1]
    K = 9 * Cin
    cols = im2col3x3(x_nhwc)
    return pl.pallas_call(
        conv_kernel,
        out_shape=jax.ShapeDtypeStruct((B, H * W, Cout), jnp.float32),
        grid=(B,),
        in_specs=[pl.BlockSpec((1, H * W, K), lambda i: (i, 0, 0)),
                  pl.BlockSpec((K, Cout), lambda i: (0, 0)),
                  pl.BlockSpec((1, Cout), lambda i: (0, 0))],
        out_specs=pl.BlockSpec((1, H * W, Cout), lambda i: (i, 0, 0)),
        compiler_params=pltpu.CompilerParams(dimension_semantics=("parallel",)),
    )(cols, w.reshape(K, Cout), b)


def pca_kl(s_cols, wq, bq, wk, bk, t_flat):
    """Returns sum_b KL(t_att_b || log_softmax(s_att_b)) (un-normalized)."""
    B, HW, K = s_cols.shape
    Sd = wq.shape[-1]
    Td = t_flat.shape[-1]
    out = pl.pallas_call(
        functools.partial(pca_kl_kernel,
                          s_scale=1.0 / math.sqrt(Sd),
                          t_scale=1.0 / math.sqrt(Td)),
        out_shape=jax.ShapeDtypeStruct((1, 1), jnp.float32),
        grid=(B,),
        in_specs=[pl.BlockSpec((1, HW, K), lambda b: (b, 0, 0)),
                  pl.BlockSpec((K, Sd), lambda b: (0, 0)),
                  pl.BlockSpec((1, Sd), lambda b: (0, 0)),
                  pl.BlockSpec((K, Sd), lambda b: (0, 0)),
                  pl.BlockSpec((1, Sd), lambda b: (0, 0)),
                  pl.BlockSpec((1, HW, Td), lambda b: (b, 0, 0))],
        out_specs=pl.BlockSpec((1, 1), lambda b: (0, 0)),
        compiler_params=pltpu.CompilerParams(
            dimension_semantics=("arbitrary",),
            vmem_limit_bytes=32 * 1024 * 1024),
    )(s_cols, wq, bq, wk, bk, t_flat)
    return out[0, 0]


def gl_mse_disc(s_feat, t_flat, wbd, bbd, params):
    """Returns (sum of squared error, sum of per-sample BCE) over the batch."""
    B, HW, Sd = s_feat.shape
    Td = t_flat.shape[-1]
    H1 = params['disc_w1'].shape[-1]
    sse, bce = pl.pallas_call(
        gl_mse_disc_kernel,
        out_shape=(jax.ShapeDtypeStruct((1, 1), jnp.float32),
                   jax.ShapeDtypeStruct((1, 1), jnp.float32)),
        grid=(B,),
        in_specs=[pl.BlockSpec((1, HW, Sd), lambda b: (b, 0, 0)),
                  pl.BlockSpec((1, HW, Td), lambda b: (b, 0, 0)),
                  pl.BlockSpec((Sd, Td), lambda b: (0, 0)),
                  pl.BlockSpec((1, Td), lambda b: (0, 0)),
                  pl.BlockSpec((Td, H1), lambda b: (0, 0)),
                  pl.BlockSpec((1, H1), lambda b: (0, 0)),
                  pl.BlockSpec((H1, H1), lambda b: (0, 0)),
                  pl.BlockSpec((1, H1), lambda b: (0, 0)),
                  pl.BlockSpec((H1, 1), lambda b: (0, 0)),
                  pl.BlockSpec((1, 1), lambda b: (0, 0))],
        out_specs=(pl.BlockSpec((1, 1), lambda b: (0, 0)),
                   pl.BlockSpec((1, 1), lambda b: (0, 0))),
        compiler_params=pltpu.CompilerParams(dimension_semantics=("arbitrary",)),
    )(s_feat, t_flat, wbd, bbd,
      params['disc_w1'], params['disc_b1'],
      params['disc_w2'], params['disc_b2'],
      params['disc_w3'], params['disc_b3'])
    return sse[0, 0], bce[0, 0]


# ----------------------------- module pieces --------------------------------

def multi_view(x, key, num_views=NUM_VIEWS):
    """MultiViewGenerator: original + resized random crops (vmapped XLA glue)."""
    views = [x]
    if num_views < 2:
        return views
    B, C, H, W = x.shape
    side = int(0.8 * min(H, W))
    starts = jax.random.randint(key, (B, 2), 0, min(H, W) - side + 1)

    def crop_resize(img, st):
        crop = jax.lax.dynamic_slice(img, (0, st[0], st[1]), (C, side, side))
        return jax.image.resize(crop, (C, H, W), method='bilinear')

    views.append(jax.vmap(crop_resize)(x, starts))
    return views


def forward(params, x_nchw):
    """CrossArchitectureKD.forward(x) == student(x) -> class logits (fused conv+GAP+head)."""
    B, _, H, W = x_nchw.shape
    cols = im2col3x3(jnp.transpose(x_nchw, (0, 2, 3, 1)))                   # (B, HW, 27)
    K = cols.shape[-1]
    out = pl.pallas_call(
        forward_kernel,
        out_shape=jax.ShapeDtypeStruct((B, 1, NUM_CLASSES), jnp.float32),
        grid=(B,),
        in_specs=[pl.BlockSpec((1, H * W, K), lambda b: (b, 0, 0)),
                  pl.BlockSpec((K, STUDENT_DIM), lambda b: (0, 0)),
                  pl.BlockSpec((1, STUDENT_DIM), lambda b: (0, 0)),
                  pl.BlockSpec((STUDENT_DIM, NUM_CLASSES), lambda b: (0, 0)),
                  pl.BlockSpec((1, NUM_CLASSES), lambda b: (0, 0))],
        out_specs=pl.BlockSpec((1, 1, NUM_CLASSES), lambda b: (b, 0, 0)),
        compiler_params=pltpu.CompilerParams(dimension_semantics=("parallel",)),
    )(cols, params['student_conv_w'].reshape(K, STUDENT_DIM), params['student_conv_b'],
      params['head_w'], params['head_b'])
    return out[:, 0, :]


def calculate_kd_loss(params, x, key):
    views = multi_view(x, key, NUM_VIEWS)
    B = x.shape[0]

    # small parameter re-packings shared across views (inside jit, negligible)
    wbd, bbd = gl_block_diag(params['gl_w'], params['gl_b'])
    wq = params['pca_q_w'].reshape(9 * STUDENT_DIM, STUDENT_DIM)
    wk = params['pca_k_w'].reshape(9 * STUDENT_DIM, STUDENT_DIM)
    bq, bk = params['pca_q_b'], params['pca_k_b']
    # NOTE: the value conv / bmm(attn, v) path of PCAProjector is dead code in the reference
    # loss (ctx is discarded) and is removed here.

    pca_l = jnp.float32(0.0)
    gl_l = jnp.float32(0.0)
    rob_l = jnp.float32(0.0)
    for v in views:
        _, _, H, W = v.shape
        HW = H * W

        # teacher (frozen synthetic backbone) at half resolution, then bilinear upsample
        # (this emulates teacher features + F.interpolate to (H, W) in the reference).
        t_in = jnp.transpose(v[:, :, ::2, ::2], (0, 2, 3, 1))
        t_feat = conv3x3(t_in, params['teacher_conv_w'], params['teacher_conv_b'])
        ht, wt = t_in.shape[1], t_in.shape[2]
        t_flat = jax.image.resize(t_feat.reshape(B, ht, wt, TEACHER_DIM),
                                  (B, H, W, TEACHER_DIM),
                                  method='bilinear').reshape(B, HW, TEACHER_DIM)

        # student features
        s_feat = conv3x3(jnp.transpose(v, (0, 2, 3, 1)),
                         params['student_conv_w'], params['student_conv_b'])    # (B, HW, Sd)

        # PCA attention + KL (F.kl_div(log_softmax(s_att), t_att, 'batchmean') -> /B)
        s_cols = im2col3x3(s_feat.reshape(B, H, W, STUDENT_DIM))                # (B, HW, 9*Sd)
        pca_l = pca_l + pca_kl(s_cols, wq, bq, wk, bk, t_flat) / B

        # GLProjector + MSE (channel_matcher = Identity) + Discriminator BCE
        sse, bce_sum = gl_mse_disc(s_feat, t_flat, wbd, bbd, params)
        gl_l = gl_l + sse / (B * HW * TEACHER_DIM)
        rob_l = rob_l + bce_sum / B

    n = len(views)
    pca_l, gl_l, rob_l = pca_l / n, gl_l / n, rob_l / n
    total = pca_l + LAMBDA_ROBUST * gl_l + rob_l
    return total, pca_l, gl_l, rob_l


# ----------------------------- parameter init -------------------------------

def _uniform(key, shape, bound):
    return jax.random.uniform(key, shape, minval=-bound, maxval=bound, dtype=jnp.float32)


def init_params(key):
    ks = iter(jax.random.split(key, 32))
    p = {}

    def conv_wb(cin, cout):
        bound = 1.0 / math.sqrt(cin * 9)
        return _uniform(next(ks), (3, 3, cin, cout), bound), _uniform(next(ks), (1, cout), bound)

    def lin_wb(fin, fout):
        bound = 1.0 / math.sqrt(fin)
        return _uniform(next(ks), (fin, fout), bound), _uniform(next(ks), (1, fout), bound)

    p['student_conv_w'], p['student_conv_b'] = conv_wb(3, STUDENT_DIM)
    p['teacher_conv_w'], p['teacher_conv_b'] = conv_wb(3, TEACHER_DIM)
    p['head_w'], p['head_b'] = lin_wb(STUDENT_DIM, NUM_CLASSES)
    p['pca_q_w'], p['pca_q_b'] = conv_wb(STUDENT_DIM, STUDENT_DIM)
    p['pca_k_w'], p['pca_k_b'] = conv_wb(STUDENT_DIM, STUDENT_DIM)
    p['pca_v_w'], p['pca_v_b'] = conv_wb(STUDENT_DIM, STUDENT_DIM)   # unused in the loss (ctx discarded)
    cg_in, cg_out = STUDENT_DIM // GL_GROUPS, TEACHER_DIM // GL_GROUPS
    bound = 1.0 / math.sqrt(cg_in)
    p['gl_w'] = _uniform(next(ks), (GL_GROUPS, cg_in, cg_out), bound)
    p['gl_b'] = _uniform(next(ks), (GL_GROUPS, 1, cg_out), bound)
    p['disc_w1'], p['disc_b1'] = lin_wb(TEACHER_DIM, DISC_HIDDEN)
    p['disc_w2'], p['disc_b2'] = lin_wb(DISC_HIDDEN, DISC_HIDDEN)
    p['disc_w3'], p['disc_b3'] = lin_wb(DISC_HIDDEN, 1)
    return p


# ----------------------------------- main ------------------------------------

if __name__ == "__main__":
    root = jax.random.PRNGKey(0)
    pkey, xkey, vkey = jax.random.split(root, 3)
    params = init_params(pkey)

    x = jax.random.normal(xkey, (2, 3, 16, 16), dtype=jnp.float32)      # NCHW, like PyTorch

    forward_jit = jax.jit(forward)
    kd_loss_jit = jax.jit(calculate_kd_loss)

    logits = forward_jit(params, x)                                     # student(x)
    total, pca_l, gl_l, rob_l = kd_loss_jit(params, x, vkey)

    jax.block_until_ready((logits, total, pca_l, gl_l, rob_l))
    print("KERNEL_OK")
</pallas_src>

<mosaic_0001>
module attributes {stable_mosaic.version = 11 : i64} {
  func.func @forward_kernel(%arg0: i32, %arg1: memref<1x256x27xf32, #tpu.memory_space<vmem>>, %arg2: memref<27x16xf32, #tpu.memory_space<vmem>>, %arg3: memref<1x16xf32, #tpu.memory_space<vmem>>, %arg4: memref<16x10xf32, #tpu.memory_space<vmem>>, %arg5: memref<1x10xf32, #tpu.memory_space<vmem>>, %arg6: memref<1x1x10xf32, #tpu.memory_space<vmem>>) attributes {dimension_semantics = [#tpu.dimension_semantics<parallel>], iteration_bounds = array<i64: 2>, scalar_prefetch = 0 : i64, scratch_operands = 0 : i64, tpu.core_type = #tpu.core_type<tc>, window_params = [{transform_indices = @transform_0, window_bounds = array<i64: 1, 256, 27>}, {pipeline_mode = #tpu.pipeline_mode<synchronous>, transform_indices = @transform_1, window_bounds = array<i64: 27, 16>}, {pipeline_mode = #tpu.pipeline_mode<synchronous>, transform_indices = @transform_2, window_bounds = array<i64: 1, 16>}, {pipeline_mode = #tpu.pipeline_mode<synchronous>, transform_indices = @transform_3, window_bounds = array<i64: 16, 10>}, {pipeline_mode = #tpu.pipeline_mode<synchronous>, transform_indices = @transform_4, window_bounds = array<i64: 1, 10>}, {transform_indices = @transform_5, window_bounds = array<i64: 1, 1, 10>}]} {
    %c0 = arith.constant 0 : index
    %c0_0 = arith.constant 0 : index
    %c0_1 = arith.constant 0 : index
    %0 = vector.load %arg1[%c0, %c0_0, %c0_1] : memref<1x256x27xf32, #tpu.memory_space<vmem>>, vector<1x256x27xf32>
    %1 = vector.shape_cast %0 : vector<1x256x27xf32> to vector<256x27xf32>
    %c0_2 = arith.constant 0 : index
    %c0_3 = arith.constant 0 : index
    %2 = vector.load %arg2[%c0_2, %c0_3] : memref<27x16xf32, #tpu.memory_space<vmem>>, vector<27x16xf32>
    %cst = arith.constant dense<0.000000e+00> : vector<256x16xf32>
    %3 = tpu.matmul %1, %2, %cst {dimension_numbers = #tpu.dot_dimension_numbers<[1], [0], [0], [1], [0, 0, 1, 1], [], []>} : vector<256x27xf32>, vector<27x16xf32>, vector<256x16xf32> -> vector<256x16xf32>
    %c0_4 = arith.constant 0 : index
    %c0_5 = arith.constant 0 : index
    %4 = vector.load %arg3[%c0_4, %c0_5] : memref<1x16xf32, #tpu.memory_space<vmem>>, vector<1x16xf32>
    %5 = vector.broadcast %4 : vector<1x16xf32> to vector<256x16xf32>
    %6 = arith.addf %3, %5 : vector<256x16xf32>
    %cst_6 = arith.constant dense<0.000000e+00> : vector<16xf32>
    %7 = vector.multi_reduction <add>, %6, %cst_6 [0] : vector<256x16xf32> to vector<16xf32>
    %8 = vector.shape_cast %7 : vector<16xf32> to vector<1x16xf32>
    %cst_7 = arith.constant 2.560000e+02 : f32
    %9 = vector.broadcast %cst_7 : f32 to vector<1x16xf32>
    %10 = arith.divf %8, %9 : vector<1x16xf32>
    %c0_8 = arith.constant 0 : index
    %c0_9 = arith.constant 0 : index
    %11 = vector.load %arg4[%c0_8, %c0_9] : memref<16x10xf32, #tpu.memory_space<vmem>>, vector<16x10xf32>
    %cst_10 = arith.constant dense<0.000000e+00> : vector<1x10xf32>
    %12 = tpu.matmul %10, %11, %cst_10 {dimension_numbers = #tpu.dot_dimension_numbers<[1], [0], [0], [1], [0, 0, 1, 1], [], []>} : vector<1x16xf32>, vector<16x10xf32>, vector<1x10xf32> -> vector<1x10xf32>
    %c0_11 = arith.constant 0 : index
    %c0_12 = arith.constant 0 : index
    %13 = vector.load %arg5[%c0_11, %c0_12] : memref<1x10xf32, #tpu.memory_space<vmem>>, vector<1x10xf32>
    %14 = arith.addf %12, %13 : vector<1x10xf32>
    %c0_13 = arith.constant 0 : index
    %c0_14 = arith.constant 0 : index
    %c0_15 = arith.constant 0 : index
    %15 = vector.load %arg6[%c0_13, %c0_14, %c0_15] : memref<1x1x10xf32, #tpu.memory_space<vmem>>, vector<1x1x10xf32>
    %16 = vector.shape_cast %15 : vector<1x1x10xf32> to vector<1x10xf32>
    %17 = vector.shape_cast %14 : vector<1x10xf32> to vector<1x1x10xf32>
    tpu.vector_store %arg6[%c0_13, %c0_14, %c0_15], %17 {strides = array<i32>} : memref<1x1x10xf32, #tpu.memory_space<vmem>>, vector<1x1x10xf32>,
    return
  }
  func.func @transform_0(%arg0: i32) -> (i32, i32, i32) {
    %c0_i32 = arith.constant 0 : i32
    %c0_i32_0 = arith.constant 0 : i32
    %c0_i32_1 = arith.constant 0 : i32
    return %arg0, %c0_i32, %c0_i32_0 : i32, i32, i32
  }
  func.func @transform_1(%arg0: i32) -> (i32, i32) {
    %c0_i32 = arith.constant 0 : i32
    %c0_i32_0 = arith.constant 0 : i32
    %c0_i32_1 = arith.constant 0 : i32
    return %c0_i32, %c0_i32_0 : i32, i32
  }
  func.func @transform_2(%arg0: i32) -> (i32, i32) {
    %c0_i32 = arith.constant 0 : i32
    %c0_i32_0 = arith.constant 0 : i32
    %c0_i32_1 = arith.constant 0 : i32
    return %c0_i32, %c0_i32_0 : i32, i32
  }
  func.func @transform_3(%arg0: i32) -> (i32, i32) {
    %c0_i32 = arith.constant 0 : i32
    %c0_i32_0 = arith.constant 0 : i32
    %c0_i32_1 = arith.constant 0 : i32
    return %c0_i32, %c0_i32_0 : i32, i32
  }
  func.func @transform_4(%arg0: i32) -> (i32, i32) {
    %c0_i32 = arith.constant 0 : i32
    %c0_i32_0 = arith.constant 0 : i32
    %c0_i32_1 = arith.constant 0 : i32
    return %c0_i32, %c0_i32_0 : i32, i32
  }
  func.func @transform_5(%arg0: i32) -> (i32, i32, i32) {
    %c0_i32 = arith.constant 0 : i32
    %c0_i32_0 = arith.constant 0 : i32
    %c0_i32_1 = arith.constant 0 : i32
    return %arg0, %c0_i32, %c0_i32_0 : i32, i32, i32
  }
}

</mosaic_0001>

<llo_original>
// kernel: forward.1
$region0: #{forward.1}
  #allocation0 [shape = 'u32[]', space=smem, size = 0x4, offset = 0x4, fixed_abs, tag = 'smem constant byte address 0x4 - core index']
  #allocation1 [shape = 'u32[72,128]{1,0:T(1,128)}', space=vmem, size = 0x9000, scoped, tag = 'internal scratch']
  %s0 = inlined_call_operand.vmem [shape: f32[2,256,27], index: 0, kind: input, shape index: {}]
  %s1 = inlined_call_operand.vmem [shape: f32[27,16], index: 1, kind: input, shape index: {}]
  %s2 = inlined_call_operand.vmem [shape: f32[1,16], index: 2, kind: input, shape index: {}]
  %s3 = inlined_call_operand.vmem [shape: f32[16,10], index: 3, kind: input, shape index: {}]
  %s4 = inlined_call_operand.vmem [shape: f32[1,10], index: 4, kind: input, shape index: {}]
  %s5 = inlined_call_operand.hbm [shape: f32[2,1,10], index: 5, kind: output, shape index: {}]
  %s6 = sld [smem:[#allocation0]]
  $region53: #{forward.1} parent=0
    _
  %s8 = ssub.s32 1, %s6
  %s9 = scalar_select 0, %s8, %s6
  $region1: #{forward.1} parent=0
    #allocation2 [shape = 'u8[1024]{0}', space=vmem, size = 0x400, scoped, tag = 'output window, operand 0']
    #allocation3 [shape = 's32[2]{0}', space=sflag, size = 0x8, scoped, tag = 'scoped memory for forward.1']
    %10 = vsyncpa [#allocation3], 0
    %s11 = scalar_lea.sflag [#allocation3], 1
    %12 = vsyncpa %s11, 0
    loop: start=0, step=1, limit=4
    $region2: #{forward.1} parent=1 // loop_pre_header
      _
    $region3: #{forward.1} parent=1 // loop_header
      %s14 = sphi 0, %s18
      %p15 = scmp.ge.s32.totalorder %s14, 4
      %s24 = sphi 0, %s26
      %s27 = sphi 0, %s24
      %s28 = sphi 0, %s27
      %s44 = sphi 0, %s28
      %s48 = sphi 0, %s48
      %s50 = sphi 0, %s48
      %s51 = sphi 0, %s50
      %s65 = sphi 0, %s51
      %s69 = sphi 0, %s69
      %s71 = sphi 0, %s69
      %s72 = sphi 0, %s71
      %s86 = sphi 0, %s72
      %s90 = sphi 0, %s90
      %s92 = sphi 0, %s90
      %s93 = sphi 0, %s92
      %s107 = sphi 0, %s93
      %s111 = sphi 0, %s111
      %s113 = sphi 0, %s111
      %s114 = sphi 0, %s113
      %s128 = sphi 0, %s114
      %s134 = sphi 0, %s136
      %s137 = sphi 0, %s134
      %s138 = sphi 0, %s137
      %s154 = sphi 0, %s138
    $region4: #{forward.1} parent=1 // loop_header_branch
      %17 = sbr.rel (%p15) target = $region8
    $region5: #{forward.1} parent=1 // loop_body
      %s19 = ssub.s32 %s14, 1
      %s20 = ssub.s32 %s14, 2
      %s21 = sadd.s32 %s14, 1
      %s22 = ssub.s32 %s14, %s21
      %p23 = scmp.eq.s32.totalorder %s22, 0
      %s25 = sadd.s32 %s24, 1
      %s26 = scalar_select %p23, %s24, %s25
      %p29 = pneg %p23
      %p30 = scmp.eq.s32.totalorder %s14, 1
      %p31 = por %p29, %p30
      %p32 = scmp.ne.s32.totalorder %s24, %s27
      %p33 = scmp.eq.s32.totalorder %s14, 0
      %p34 = por %p32, %p33
      %p35 = scmp.ne.s32.totalorder %s24, %s27
      %p36 = scmp.eq.s32.totalorder %s19, 1
      %p37 = por %p35, %p36
      %p38 = scmp.ne.s32.totalorder %s27, %s28
      %p39 = scmp.eq.s32.totalorder %s19, 0
      %p40 = por %p38, %p39
      %p41 = scmp.ne.s32.totalorder %s27, %s28
      %p42 = scmp.eq.s32.totalorder %s20, 1
      %p43 = por %p41, %p42
      %p45 = scmp.ne.s32.totalorder %s28, %s44
      %p46 = scmp.eq.s32.totalorder %s20, 0
      %p47 = por %p45, %p46
      %s49 = sadd.s32 %s48, 1
      %p52 = scmp.eq.s32.totalorder %s14, 1
      %p53 = scmp.ne.s32.totalorder %s48, %s50
      %p54 = scmp.eq.s32.totalorder %s14, 0
      %p55 = por %p53, %p54
      %p56 = scmp.ne.s32.totalorder %s48, %s50
      %p57 = scmp.eq.s32.totalorder %s19, 1
      %p58 = por %p56, %p57
      %p59 = scmp.ne.s32.totalorder %s50, %s51
      %p60 = scmp.eq.s32.totalorder %s19, 0
      %p61 = por %p59, %p60
      %p62 = scmp.ne.s32.totalorder %s50, %s51
      %p63 = scmp.eq.s32.totalorder %s20, 1
      %p64 = por %p62, %p63
      %p66 = scmp.ne.s32.totalorder %s51, %s65
      %p67 = scmp.eq.s32.totalorder %s20, 0
      %p68 = por %p66, %p67
      %s70 = sadd.s32 %s69, 1
      %p73 = scmp.eq.s32.totalorder %s14, 1
      %p74 = scmp.ne.s32.totalorder %s69, %s71
      %p75 = scmp.eq.s32.totalorder %s14, 0
      %p76 = por %p74, %p75
      %p77 = scmp.ne.s32.totalorder %s69, %s71
      %p78 = scmp.eq.s32.totalorder %s19, 1
      %p79 = por %p77, %p78
      %p80 = scmp.ne.s32.totalorder %s71, %s72
      %p81 = scmp.eq.s32.totalorder %s19, 0
      %p82 = por %p80, %p81
      %p83 = scmp.ne.s32.totalorder %s71, %s72
      %p84 = scmp.eq.s32.totalorder %s20, 1
      %p85 = por %p83, %p84
      %p87 = scmp.ne.s32.totalorder %s72, %s86
      %p88 = scmp.eq.s32.totalorder %s20, 0
      %p89 = por %p87, %p88
      %s91 = sadd.s32 %s90, 1
      %p94 = scmp.eq.s32.totalorder %s14, 1
      %p95 = scmp.ne.s32.totalorder %s90, %s92
      %p96 = scmp.eq.s32.totalorder %s14, 0
      %p97 = por %p95, %p96
      %p98 = scmp.ne.s32.totalorder %s90, %s92
      %p99 = scmp.eq.s32.totalorder %s19, 1
      %p100 = por %p98, %p99
      %p101 = scmp.ne.s32.totalorder %s92, %s93
      %p102 = scmp.eq.s32.totalorder %s19, 0
      %p103 = por %p101, %p102
      %p104 = scmp.ne.s32.totalorder %s92, %s93
      %p105 = scmp.eq.s32.totalorder %s20, 1
      %p106 = por %p104, %p105
      %p108 = scmp.ne.s32.totalorder %s93, %s107
      %p109 = scmp.eq.s32.totalorder %s20, 0
      %p110 = por %p108, %p109
      %s112 = sadd.s32 %s111, 1
      %p115 = scmp.eq.s32.totalorder %s14, 1
      %p116 = scmp.ne.s32.totalorder %s111, %s113
      %p117 = scmp.eq.s32.totalorder %s14, 0
      %p118 = por %p116, %p117
      %p119 = scmp.ne.s32.totalorder %s111, %s113
      %p120 = scmp.eq.s32.totalorder %s19, 1
      %p121 = por %p119, %p120
      %p122 = scmp.ne.s32.totalorder %s113, %s114
      %p123 = scmp.eq.s32.totalorder %s19, 0
      %p124 = por %p122, %p123
      %p125 = scmp.ne.s32.totalorder %s113, %s114
      %p126 = scmp.eq.s32.totalorder %s20, 1
      %p127 = por %p125, %p126
      %p129 = scmp.ne.s32.totalorder %s114, %s128
      %p130 = scmp.eq.s32.totalorder %s20, 0
      %p131 = por %p129, %p130
      %s132 = ssub.s32 %s14, %s21
      %p133 = scmp.eq.s32.totalorder %s132, 0
      %s135 = sadd.s32 %s134, 1
      %s136 = scalar_select %p133, %s134, %s135
      %p139 = pneg %p133
      %p140 = scmp.eq.s32.totalorder %s14, 1
      %p141 = por %p139, %p140
      %p142 = scmp.ne.s32.totalorder %s134, %s137
      %p143 = scmp.eq.s32.totalorder %s14, 0
      %p144 = por %p142, %p143
      %p145 = scmp.ne.s32.totalorder %s134, %s137
      %p146 = scmp.eq.s32.totalorder %s19, 1
      %p147 = por %p145, %p146
      %p148 = scmp.ne.s32.totalorder %s137, %s138
      %p149 = scmp.eq.s32.totalorder %s19, 0
      %p150 = por %p148, %p149
      %p151 = scmp.ne.s32.totalorder %s137, %s138
      %p152 = scmp.eq.s32.totalorder %s20, 1
      %p153 = por %p151, %p152
      %p155 = scmp.ne.s32.totalorder %s138, %s154
      %p156 = scmp.eq.s32.totalorder %s20, 0
      %p157 = por %p155, %p156
      %p158 = scmp.le.s32.totalorder 1, %s14
      %p159 = scmp.lt.s32.totalorder %s14, 3
      %p160 = pnand %p158, %p159
      %p161 = pneg %p160
      // Predicated region
      $region9: #{forward.1} parent=5 // pred_check
        _
      $region10: #{forward.1} parent=5 // pred_check_branch
        %163 = sbr.rel (%p160) target = $region12
      $region11: #{forward.1} parent=5 // pred_region
        %s164 = ssub.s32 %s14, 1
        // Predicated region
        $region13: #{forward.1} parent=11 // pred_check
          %p165 = pneg %p61
        $region14: #{forward.1} parent=11 // pred_check_branch
          %167 = sbr.rel (%p165) target = $region16
        $region15: #{forward.1} parent=11 // pred_region
          _
        $region16: #{forward.1} parent=11 // pred_fallthru
          _
        // Predicated region
        $region17: #{forward.1} parent=11 // pred_check
          %p168 = pneg %p82
        $region18: #{forward.1} parent=11 // pred_check_branch
          %170 = sbr.rel (%p168) target = $region20
        $region19: #{forward.1} parent=11 // pred_region
          _
        $region20: #{forward.1} parent=11 // pred_fallthru
          _
        // Predicated region
        $region21: #{forward.1} parent=11 // pred_check
          %p171 = pneg %p103
        $region22: #{forward.1} parent=11 // pred_check_branch
          %173 = sbr.rel (%p171) target = $region24
        $region23: #{forward.1} parent=11 // pred_region
          _
        $region24: #{forward.1} parent=11 // pred_fallthru
          _
        // Predicated region
        $region25: #{forward.1} parent=11 // pred_check
          %p174 = pneg %p124
        $region26: #{forward.1} parent=11 // pred_check_branch
          %176 = sbr.rel (%p174) target = $region28
        $region27: #{forward.1} parent=11 // pred_region
          _
        $region28: #{forward.1} parent=11 // pred_fallthru
          _
      $region12: #{forward.1} parent=5 // pred_fallthru
        _
      %p177 = scmp.lt.s32.totalorder %s14, 2
      // Predicated region
      $region29: #{forward.1} parent=5 // pred_check
        %p178 = pneg %p177
      $region30: #{forward.1} parent=5 // pred_check_branch
        %180 = sbr.rel (%p178) target = $region32
      $region31: #{forward.1} parent=5 // pred_region
        // Predicated region
        $region33: #{forward.1} parent=31 // pred_check
          %p181 = pneg %p34
        $region34: #{forward.1} parent=31 // pred_check_branch
          %183 = sbr.rel (%p181) target = $region36
        $region35: #{forward.1} parent=31 // pred_region
          %p184 = scmp.lt.s32.totalorder %s14, 1
          %s185 = scalar_select %p184, %s14, 1
          %s186 = smul.addr %s185, 32
          %s187 = smul.addr %s186, 8
          %s188 = scalar_lea.vmem %s0, %s187
        $region36: #{forward.1} parent=31 // pred_fallthru
          _
      $region32: #{forward.1} parent=5 // pred_fallthru
        _
      %p189 = scmp.le.s32.totalorder 1, %s14
      %p190 = scmp.lt.s32.totalorder %s14, 3
      %p191 = pnand %p189, %p190
      %p192 = pneg %p191
      // Predicated region
      $region37: #{forward.1} parent=5 // pred_check
        _
      $region38: #{forward.1} parent=5 // pred_check_branch
        %194 = sbr.rel (%p191) target = $region40
      $region39: #{forward.1} parent=5 // pred_region
        %s195 = ssub.s32 %s14, 1
        %p196 = scmp.lt.s32.totalorder %s19, 1
        %s197 = scalar_select %p196, %s19, 1
        %s198 = smul.addr %s197, 32
        %s199 = smul.addr %s198, 8
        %s200 = scalar_lea.vmem %s0, %s199
        %p201 = pneg %p40
        %p202 = pneg %p37
        %p203 = pneg %p61
        %p204 = pneg %p58
        %p205 = pneg %p82
        %p206 = pneg %p79
        %p207 = pneg %p103
        %p208 = pneg %p100
        %p209 = pneg %p124
        %p210 = pneg %p121
        %p211 = pneg %p150
        %p212 = pneg %p147
        %s213 = sand.u32 %s137, 1
        %s214 = scalar_lea.sflag [#allocation3], %s213
        %s215 = sand.u32 %s137, 1
        %s216 = scalar_lea.vmem [#allocation2], %s215
        %p217 = scmp.lt.s32.totalorder %s19, 1
        %s218 = scalar_select %p217, %s19, 1
        %s219 = smul.addr %s218, 32
        %s220 = smul.addr %s219, 8
        %s221 = scalar_lea.vmem %s0, %s220
        %v222 = vld [vmem:[%s221] sm:$0xff]
        %v223 = vld [vmem:[%s221 + $0x8] sm:$0xff]
        %v224 = vld [vmem:[%s221 + $0x10] sm:$0xff]
        %v225 = vld [vmem:[%s221 + $0x18] sm:$0xff]
        %v226 = vld [vmem:[%s221 + $0x20] sm:$0xff]
        %v227 = vld [vmem:[%s221 + $0x28] sm:$0xff]
        %v228 = vld [vmem:[%s221 + $0x30] sm:$0xff]
        %v229 = vld [vmem:[%s221 + $0x38] sm:$0xff]
        %v230 = vld [vmem:[%s221 + $0x40] sm:$0xff]
        %v231 = vld [vmem:[%s221 + $0x48] sm:$0xff]
        %v232 = vld [vmem:[%s221 + $0x50] sm:$0xff]
        %v233 = vld [vmem:[%s221 + $0x58] sm:$0xff]
        %v234 = vld [vmem:[%s221 + $0x60] sm:$0xff]
        %v235 = vld [vmem:[%s221 + $0x68] sm:$0xff]
        %v236 = vld [vmem:[%s221 + $0x70] sm:$0xff]
        %v237 = vld [vmem:[%s221 + $0x78] sm:$0xff]
        %v238 = vld [vmem:[%s221 + $0x80] sm:$0xff]
        %v239 = vld [vmem:[%s221 + $0x88] sm:$0xff]
        %v240 = vld [vmem:[%s221 + $0x90] sm:$0xff]
        %v241 = vld [vmem:[%s221 + $0x98] sm:$0xff]
        %v242 = vld [vmem:[%s221 + $0xa0] sm:$0xff]
        %v243 = vld [vmem:[%s221 + $0xa8] sm:$0xff]
        %v244 = vld [vmem:[%s221 + $0xb0] sm:$0xff]
        %v245 = vld [vmem:[%s221 + $0xb8] sm:$0xff]
        %v246 = vld [vmem:[%s221 + $0xc0] sm:$0xff]
        %v247 = vld [vmem:[%s221 + $0xc8] sm:$0xff]
        %v248 = vld [vmem:[%s221 + $0xd0] sm:$0xff]
        %v249 = vld [vmem:[%s221 + $0xd8] sm:$0xff]
        %v250 = vld [vmem:[%s221 + $0xe0] sm:$0xff]
        %v251 = vld [vmem:[%s221 + $0xe8] sm:$0xff]
        %v252 = vld [vmem:[%s221 + $0xf0] sm:$0xff]
        %v253 = vld [vmem:[%s221 + $0xf8] sm:$0xff]
        %v254 = vld [vmem:[%s1] sm:$0xff]
        %v255 = vld [vmem:[%s1 + $0x8] sm:$0xff]
        %v256 = vld [vmem:[%s1 + $0x10] sm:$0xff]
        %v257 = vld [vmem:[%s1 + $0x18] sm:$0x7]
        %v258 = vld [vmem:[%s2] sm:$0x1]
        %v260 = vperm.slane %v258, 0
        %vm262 = vcmask 220160
        %v264 = vsel %vm262, %v222, 0
        %v267 = vsel %vm262, %v223, 0
        %v270 = vsel %vm262, %v224, 0
        %v273 = vsel %vm262, %v225, 0
        %v276 = vsel %vm262, %v226, 0
        %v279 = vsel %vm262, %v227, 0
        %v282 = vsel %vm262, %v228, 0
        %v285 = vsel %vm262, %v229, 0
        %v288 = vsel %vm262, %v230, 0
        %v291 = vsel %vm262, %v231, 0
        %v294 = vsel %vm262, %v232, 0
        %v297 = vsel %vm262, %v233, 0
        %v300 = vsel %vm262, %v234, 0
        %v303 = vsel %vm262, %v235, 0
        %v306 = vsel %vm262, %v236, 0
        %v309 = vsel %vm262, %v237, 0
        %v312 = vsel %vm262, %v238, 0
        %v315 = vsel %vm262, %v239, 0
        %v318 = vsel %vm262, %v240, 0
        %v321 = vsel %vm262, %v241, 0
        %v324 = vsel %vm262, %v242, 0
        %v327 = vsel %vm262, %v243, 0
        %v330 = vsel %vm262, %v244, 0
        %v333 = vsel %vm262, %v245, 0
        %v336 = vsel %vm262, %v246, 0
        %v339 = vsel %vm262, %v247, 0
        %v342 = vsel %vm262, %v248, 0
        %v345 = vsel %vm262, %v249, 0
        %v348 = vsel %vm262, %v250, 0
        %v351 = vsel %vm262, %v251, 0
        %v354 = vsel %vm262, %v252, 0
        %v357 = vsel %vm262, %v253, 0
        %vm359 = vcmask 1042432
        %v361 = vsel %vm359, %v257, 0
        %363 = vmatpush.msra.mxu0 0.0
        %364 = vmatpush.msra.mxu0 0.0
        %365 = vmatpush.msra.mxu0 0.0
        %366 = vmatpush.msra.mxu0 0.0
        %367 = vmatpush.msra.mxu0 0.0
        %368 = vmatpush.msra.mxu0 0.0
        %369 = vmatpush.msra.mxu0 0.0
        %370 = vmatpush.msra.mxu0 0.0
        %371 = vmatpush.msra.mxu0 0.0
        %372 = vmatpush.msra.mxu0 0.0
        %373 = vmatpush.msra.mxu0 0.0
        %374 = vmatpush.msra.mxu0 0.0
        %375 = vmatpush.msra.mxu0 %v361
        %376 = vmatpush.msra.mxu0 %v256
        %377 = vmatpush.msra.mxu0 %v255
        %378 = vmatpush.msra.mxu0 %v254
        %379 = vmatmul.f32.gmra.mxu0 %v264
        %v380 = vpop.f32.mrf.mxu0
        %v381 = vadd.f32 %v260, %v380
        %382 = vmatmul.f32.gmra.mxu0 %v267
        %v383 = vpop.f32.mrf.mxu0
        %v384 = vadd.f32 %v260, %v383
        %385 = vmatmul.f32.gmra.mxu0 %v270
        %v386 = vpop.f32.mrf.mxu0
        %v387 = vadd.f32 %v260, %v386
        %388 = vmatmul.f32.gmra.mxu0 %v273
        %v389 = vpop.f32.mrf.mxu0
        %v390 = vadd.f32 %v260, %v389
        %391 = vmatmul.f32.gmra.mxu0 %v276
        %v392 = vpop.f32.mrf.mxu0
        %v393 = vadd.f32 %v260, %v392
        %394 = vmatmul.f32.gmra.mxu0 %v279
        %v395 = vpop.f32.mrf.mxu0
        %v396 = vadd.f32 %v260, %v395
        %397 = vmatmul.f32.gmra.mxu0 %v282
        %v398 = vpop.f32.mrf.mxu0
        %v399 = vadd.f32 %v260, %v398
        %400 = vmatmul.f32.gmra.mxu0 %v285
        %v401 = vpop.f32.mrf.mxu0
        %v402 = vadd.f32 %v260, %v401
        %403 = vmatmul.f32.gmra.mxu0 %v288
        %v404 = vpop.f32.mrf.mxu0
        %v405 = vadd.f32 %v260, %v404
        %406 = vmatmul.f32.gmra.mxu0 %v291
        %v407 = vpop.f32.mrf.mxu0
        %v408 = vadd.f32 %v260, %v407
        %409 = vmatmul.f32.gmra.mxu0 %v294
        %v410 = vpop.f32.mrf.mxu0
        %v411 = vadd.f32 %v260, %v410
        %412 = vmatmul.f32.gmra.mxu0 %v297
        %v413 = vpop.f32.mrf.mxu0
        %v414 = vadd.f32 %v260, %v413
        %415 = vmatmul.f32.gmra.mxu0 %v300
        %v416 = vpop.f32.mrf.mxu0
        %v417 = vadd.f32 %v260, %v416
        %418 = vmatmul.f32.gmra.mxu0 %v303
        %v419 = vpop.f32.mrf.mxu0
        %v420 = vadd.f32 %v260, %v419
        %421 = vmatmul.f32.gmra.mxu0 %v306
        %v422 = vpop.f32.mrf.mxu0
        %v423 = vadd.f32 %v260, %v422
        %424 = vmatmul.f32.gmra.mxu0 %v309
        %v425 = vpop.f32.mrf.mxu0
        %v426 = vadd.f32 %v260, %v425
        %427 = vmatmul.f32.gmra.mxu0 %v312
        %v428 = vpop.f32.mrf.mxu0
        %v429 = vadd.f32 %v260, %v428
        %430 = vmatmul.f32.gmra.mxu0 %v315
        %v431 = vpop.f32.mrf.mxu0
        %v432 = vadd.f32 %v260, %v431
        %433 = vmatmul.f32.gmra.mxu0 %v318
        %v434 = vpop.f32.mrf.mxu0
        %v435 = vadd.f32 %v260, %v434
        %436 = vmatmul.f32.gmra.mxu0 %v321
        %v437 = vpop.f32.mrf.mxu0
        %v438 = vadd.f32 %v260, %v437
        %439 = vmatmul.f32.gmra.mxu0 %v324
        %v440 = vpop.f32.mrf.mxu0
        %v441 = vadd.f32 %v260, %v440
        %442 = vmatmul.f32.gmra.mxu0 %v327
        %v443 = vpop.f32.mrf.mxu0
        %v444 = vadd.f32 %v260, %v443
        %445 = vmatmul.f32.gmra.mxu0 %v330
        %v446 = vpop.f32.mrf.mxu0
        %v447 = vadd.f32 %v260, %v446
        %448 = vmatmul.f32.gmra.mxu0 %v333
        %v449 = vpop.f32.mrf.mxu0
        %v450 = vadd.f32 %v260, %v449
        %451 = vmatmul.f32.gmra.mxu0 %v336
        %v452 = vpop.f32.mrf.mxu0
        %v453 = vadd.f32 %v260, %v452
        %454 = vmatmul.f32.gmra.mxu0 %v339
        %v455 = vpop.f32.mrf.mxu0
        %v456 = vadd.f32 %v260, %v455
        %457 = vmatmul.f32.gmra.mxu0 %v342
        %v458 = vpop.f32.mrf.mxu0
        %v459 = vadd.f32 %v260, %v458
        %460 = vmatmul.f32.gmra.mxu0 %v345
        %v461 = vpop.f32.mrf.mxu0
        %v462 = vadd.f32 %v260, %v461
        %463 = vmatmul.f32.gmra.mxu0 %v348
        %v464 = vpop.f32.mrf.mxu0
        %v465 = vadd.f32 %v260, %v464
        %466 = vmatmul.f32.gmra.mxu0 %v351
        %v467 = vpop.f32.mrf.mxu0
        %v468 = vadd.f32 %v260, %v467
        %469 = vmatmul.f32.gmra.mxu0 %v354
        %v470 = vpop.f32.mrf.mxu0
        %v471 = vadd.f32 %v260, %v470
        %472 = vmatmul.f32.gmra.mxu0 %v357
        %v473 = vpop.f32.mrf.mxu0
        %v474 = vadd.f32 %v260, %v473
        %475 = vdwg.mxu0
        %vm476 = vcmask 130048
        %v477 = vsel %vm476, %v381, 0.0
        %v478 = vsel %vm476, %v384, 0.0
        %v479 = vadd.f32 %v477, %v478
        %v480 = vsel %vm476, %v387, 0.0
        %v481 = vadd.f32 %v479, %v480
        %v482 = vsel %vm476, %v390, 0.0
        %v483 = vadd.f32 %v481, %v482
        %v484 = vsel %vm476, %v393, 0.0
        %v485 = vadd.f32 %v483, %v484
        %v486 = vsel %vm476, %v396, 0.0
        %v487 = vadd.f32 %v485, %v486
        %v488 = vsel %vm476, %v399, 0.0
        %v489 = vadd.f32 %v487, %v488
        %v490 = vsel %vm476, %v402, 0.0
        %v491 = vadd.f32 %v489, %v490
        %v492 = vsel %vm476, %v405, 0.0
        %v493 = vadd.f32 %v491, %v492
        %v494 = vsel %vm476, %v408, 0.0
        %v495 = vadd.f32 %v493, %v494
        %v496 = vsel %vm476, %v411, 0.0
        %v497 = vadd.f32 %v495, %v496
        %v498 = vsel %vm476, %v414, 0.0
        %v499 = vadd.f32 %v497, %v498
        %v500 = vsel %vm476, %v417, 0.0
        %v501 = vadd.f32 %v499, %v500
        %v502 = vsel %vm476, %v420, 0.0
        %v503 = vadd.f32 %v501, %v502
        %v504 = vsel %vm476, %v423, 0.0
        %v505 = vadd.f32 %v503, %v504
        %v506 = vsel %vm476, %v426, 0.0
        %v507 = vadd.f32 %v505, %v506
        %v508 = vsel %vm476, %v429, 0.0
        %v509 = vadd.f32 %v507, %v508
        %v510 = vsel %vm476, %v432, 0.0
        %v511 = vadd.f32 %v509, %v510
        %v512 = vsel %vm476, %v435, 0.0
        %v513 = vadd.f32 %v511, %v512
        %v514 = vsel %vm476, %v438, 0.0
        %v515 = vadd.f32 %v513, %v514
        %v516 = vsel %vm476, %v441, 0.0
        %v517 = vadd.f32 %v515, %v516
        %v518 = vsel %vm476, %v444, 0.0
        %v519 = vadd.f32 %v517, %v518
        %v520 = vsel %vm476, %v447, 0.0
        %v521 = vadd.f32 %v519, %v520
        %v522 = vsel %vm476, %v450, 0.0
        %v523 = vadd.f32 %v521, %v522
        %v524 = vsel %vm476, %v453, 0.0
        %v525 = vadd.f32 %v523, %v524
        %v526 = vsel %vm476, %v456, 0.0
        %v527 = vadd.f32 %v525, %v526
        %v528 = vsel %vm476, %v459, 0.0
        %v529 = vadd.f32 %v527, %v528
        %v530 = vsel %vm476, %v462, 0.0
        %v531 = vadd.f32 %v529, %v530
        %v532 = vsel %vm476, %v465, 0.0
        %v533 = vadd.f32 %v531, %v532
        %v534 = vsel %vm476, %v468, 0.0
        %v535 = vadd.f32 %v533, %v534
        %v536 = vsel %vm476, %v471, 0.0
        %v537 = vadd.f32 %v535, %v536
        %v538 = vsel %vm476, %v474, 0.0
        %v539 = vadd.f32 %v537, %v538
        %v540 = vrot.slane %v539, 4
        %v541 = vadd.f32 %v539, %v540
        %v542 = vrot.slane %v541, 2
        %v543 = vadd.f32 %v541, %v542
        %v544 = vrot.slane %v543, 1
        %v545 = vadd.f32 %v543, %v544
        %v546 = vrcp.pop 256.0
        %v547 = vmul.f32 256.0, %v546
        %v548 = vsub.f32 1.0, %v547
        %v549 = vmul.f32 %v546, %v548
        %v550 = vadd.f32 %v546, %v549
        %vm551 = vweird.f32 %v546
        %v552 = vsel %vm551, %v546, %v550
        %v553 = vmul.f32 %v545, %v552
        %v554 = vld [vmem:[%s3] sm:$0xff]
        %v555 = vld [vmem:[%s3 + $0x8] sm:$0xff]
        %v556 = vld [vmem:[%s4] sm:$0x1]
        %v558 = vsel %vm476, %v553, 0
        %560 = vmatpush.msra.mxu0 0.0
        %561 = vmatpush.msra.mxu0 0.0
        %562 = vmatpush.msra.mxu0 0.0
        %563 = vmatpush.msra.mxu0 0.0
        %564 = vmatpush.msra.mxu0 0.0
        %565 = vmatpush.msra.mxu0 0.0
        %566 = vmatpush.msra.mxu0 0.0
        %567 = vmatpush.msra.mxu0 0.0
        %568 = vmatpush.msra.mxu0 0.0
        %569 = vmatpush.msra.mxu0 0.0
        %570 = vmatpush.msra.mxu0 0.0
        %571 = vmatpush.msra.mxu0 0.0
        %572 = vmatpush.msra.mxu0 0.0
        %573 = vmatpush.msra.mxu0 0.0
        %574 = vmatpush.msra.mxu0 %v555
        %575 = vmatpush.msra.mxu0 %v554
        %576 = vmatmul.f32.gmra.mxu0 %v558
        %v577 = vpop.f32.mrf.mxu0
        %v578 = vadd.f32 %v556, %v577
        %579 = vdwg.mxu0
        %vm580 = vcmask 73728
        %581 = vst.msk [vmem:[%s216] sm:$0x1] %vm580, %v578
        %s582 = sand.u32 %s137, 1
        %s583 = scalar_lea.sflag [#allocation3], %s582
        %s584 = sand.u32 %s137, 1
        %s585 = scalar_lea.vmem [#allocation2], %s584
        // Predicated region
        $region41: #{forward.1} parent=39 // pred_check
          %p586 = pneg %p147
        $region42: #{forward.1} parent=39 // pred_check_branch
          %588 = sbr.rel (%p586) target = $region44
        $region43: #{forward.1} parent=39 // pred_region
          %590 = vsyncadd %s583, 0
          %s591 = scalar_lea.hbm %s5, %s19
          %s593 = sshll.u32 %s585, 4
          %s594 = int_to_ptr.vmem [resolvable:$true] %s593
          %s595 = sshll.u32 %s591, 4
          %s596 = int_to_ptr.hbm [resolvable:$true] %s595
          %598 = dma.vmem_to_hbm [thread:$0]  %s594, 16, %s596, %s583
        $region44: #{forward.1} parent=39 // pred_fallthru
          _
      $region40: #{forward.1} parent=5 // pred_fallthru
        _
      %p599 = scmp.le.s32.totalorder 2, %s14
      // Predicated region
      $region45: #{forward.1} parent=5 // pred_check
        %p600 = pneg %p599
      $region46: #{forward.1} parent=5 // pred_check_branch
        %602 = sbr.rel (%p600) target = $region48
      $region47: #{forward.1} parent=5 // pred_region
        %s603 = ssub.s32 %s14, 2
        // Predicated region
        $region49: #{forward.1} parent=47 // pred_check
          %p604 = pneg %p153
        $region50: #{forward.1} parent=47 // pred_check_branch
          %606 = sbr.rel (%p604) target = $region52
        $region51: #{forward.1} parent=47 // pred_region
          %s607 = sand.u32 %s138, 1
          %s608 = scalar_lea.sflag [#allocation3], %s607
          %s609 = sand.u32 %s138, 1
          %s610 = scalar_lea.vmem [#allocation2], %s609
          %612 = dma.done %s608, 16
        $region52: #{forward.1} parent=47 // pred_fallthru
          _
      $region48: #{forward.1} parent=5 // pred_fallthru
        _
    $region6: #{forward.1} parent=1 // loop_footer
      %s18 = sadd.s32 1, %s14
    $region7: #{forward.1} parent=1 // loop_footer_branch
      %13 = sbr.rel target = $region3
    $region8: #{forward.1} parent=1 // loop_exit
      _
    %613 = vsyncpa [#allocation3], 1
    %s614 = scalar_lea.sflag [#allocation3], 1
    %615 = vsyncpa %s614, 1

</llo_original>
